<compile_context>
chip_gen: v6e
topology: v6e:2x2x1
jax: 0.10.0
libtpu: 0.0.40
codegen_flags: <defaults>
</compile_context>

<pallas_src>
import jax
import jax.numpy as jnp
from jax.experimental import pallas as pl
from jax.experimental.pallas import tpu as pltpu

EPS = 1e-5  # nn.LayerNorm default


def _round_up(a, m):
    return ((a + m - 1) // m) * m


def _sublane_pack(dtype):
    bits = jnp.dtype(dtype).itemsize * 8
    if bits >= 32:
        return 8
    if bits == 16:
        return 16
    return 32


def _pick_col_tile(hp, tile_cols):
    """Largest multiple-of-128 divisor of hp that is <= tile_cols."""
    tile_cols = max(int(tile_cols), 128)
    units = hp // 128
    best = 1
    for d in range(1, units + 1):
        if units % d == 0 and d * 128 <= tile_cols:
            best = d
    return best * 128


def _pick_row_tile(rows, tile_rows, sub, n_col_blocks):
    tr = min(int(tile_rows), _round_up(rows, sub))
    tr = _round_up(tr, sub)
    # v7x megacore: make sure there are >= 2 blocks on a parallel axis.
    if n_col_blocks == 1 and _round_up(rows, tr) // tr == 1 and rows > sub:
        half = _round_up((rows + 1) // 2, sub)
        if _round_up(rows, half) // half >= 2:
            tr = half
    return tr


def _vmem_limit_bytes(tr, d, tc, x_bytes, comp_bytes, out_bytes, const_bufs):
    est = (
        2 * tr * d * x_bytes                   # double-buffered x tile
        + const_bufs * d * tc * comp_bytes     # resident weight slab
        + const_bufs * (2 * d + tc) * 4        # gamma / beta / bias
        + 2 * tr * tc * out_bytes              # double-buffered output tile
        + tr * d * comp_bytes                  # cached `normed` scratch
        + 3 * tr * d * 4 + 2 * tr * tc * 4     # f32 intermediates / accumulator
    )
    est = (est * 3) // 2 + (4 << 20)
    return int(max(32 << 20, min(est, 100 << 20)))


def prenorm_kernel(x_ref, gamma_ref, beta_ref, w_ref, b_ref, o_ref, normed_ref):
    """Fused LayerNorm (over last dim) + Linear `fn`.

    x_ref:      (TR, D)   tile of rows
    gamma_ref:  (1, D)    LayerNorm weight
    beta_ref:   (1, D)    LayerNorm bias
    w_ref:      (D, TC)   Linear weight column-tile, pre-transposed & pre-cast
    b_ref:      (1, TC)   Linear bias column-tile (f32)
    o_ref:      (TR, TC)  output tile
    normed_ref: (TR, D)   VMEM scratch caching LN(x) across column tiles
    """
    j = pl.program_id(1)

    # LayerNorm only once per row block (j == 0); reused for every column tile.
    @pl.when(j == 0)
    def _():
        x = x_ref[...].astype(jnp.float32)
        # TODO(synk): single-pass stats (E[x^2]-mean^2) would save one VPU
        # sweep on v5e; kept two-pass to match torch.nn.LayerNorm numerics.
        mean = jnp.mean(x, axis=-1, keepdims=True)
        xc = x - mean
        var = jnp.mean(xc * xc, axis=-1, keepdims=True)   # biased, like torch
        inv = jax.lax.rsqrt(var + EPS)
        normed = (xc * inv) * gamma_ref[...].astype(jnp.float32) \
            + beta_ref[...].astype(jnp.float32)
        normed_ref[...] = normed.astype(normed_ref.dtype)

    # fn: Linear.  bf16 MXU operands if compute dtype is bf16; f32 accumulate.
    y = jnp.dot(normed_ref[...], w_ref[...], preferred_element_type=jnp.float32)
    y = y + b_ref[...].astype(jnp.float32)
    o_ref[...] = y.astype(o_ref.dtype)


def prenorm_prepare(gamma, beta, w, b, *, compute_dtype=None):
    """One-time parameter prep (hoist out of the forward path).

    w is PyTorch-style (out, in); it is transposed to (in, out), cast to the
    matmul compute dtype, and lane-padded (out -> multiple of 128) here, once.
    Pass compute_dtype=jnp.bfloat16 for full MXU throughput (esp. v5e).
    """
    H, D = w.shape
    if compute_dtype is None:
        compute_dtype = w.dtype
    Hp = _round_up(H, 128)
    wT = jnp.transpose(w).astype(compute_dtype)          # (D, H)
    b1 = b.astype(jnp.float32)
    if Hp != H:
        wT = jnp.pad(wT, ((0, 0), (0, Hp - H)))
        b1 = jnp.pad(b1, (0, Hp - H))
    return dict(
        gamma=gamma.reshape(1, D),
        beta=beta.reshape(1, D),
        w_t=wT,                      # (D, Hp), compute dtype
        bias=b1.reshape(1, Hp),      # (1, Hp), f32
        out_features=H,
    )


def prenorm_apply(x, params, *, out_dtype=None, tile_rows=512, tile_cols=1024):
    """x: (B, N, D); params from prenorm_prepare().  Returns fn(LayerNorm(x)).

    tile_rows=512 is a good default on v7x; 1024 is fine on v5e/v6e (128 MiB
    VMEM) for D <= ~2K.
    """
    B, N, D = x.shape
    rows = B * N
    wT = params["w_t"]
    Hp = wT.shape[1]
    H = params["out_features"]
    compute_dtype = wT.dtype
    out_dtype = x.dtype if out_dtype is None else out_dtype

    # Column tiling: lane-dense divisor of Hp (no padding to a multiple of tc).
    tc = _pick_col_tile(Hp, tile_cols)
    n_col = Hp // tc

    # Row tiling: dtype-aware sublane pack; guarantee >=2 grid blocks (v7x).
    sub = max(_sublane_pack(x.dtype), _sublane_pack(out_dtype))
    tr = _pick_row_tile(rows, tile_rows, sub, n_col)
    rows_p = _round_up(rows, tr)
    n_row = rows_p // tr

    x2 = x.reshape(rows, D)
    if rows_p != rows:
        x2 = jnp.pad(x2, ((0, rows_p - rows), (0, 0)))

    gamma2, beta2, b2 = params["gamma"], params["beta"], params["bias"]

    # Column axis must be sequential when LN results are reused across it.
    dims = ("parallel", "arbitrary") if n_col > 1 else ("parallel", "parallel")

    def build_specs(single_buffer_consts):
        kw = {"pipeline_mode": pl.Buffered(1)} if single_buffer_consts else {}
        in_specs = [
            pl.BlockSpec((tr, D), lambda i, j: (i, 0)),
            pl.BlockSpec((1, D), lambda i, j: (0, 0), **kw),
            pl.BlockSpec((1, D), lambda i, j: (0, 0), **kw),
            pl.BlockSpec((D, tc), lambda i, j: (0, j), **kw),
            pl.BlockSpec((1, tc), lambda i, j: (0, j), **kw),
        ]
        out_spec = pl.BlockSpec((tr, tc), lambda i, j: (i, j))
        return in_specs, out_spec

    vmem_limit = _vmem_limit_bytes(
        tr, D, tc,
        jnp.dtype(x.dtype).itemsize,
        jnp.dtype(compute_dtype).itemsize,
        jnp.dtype(out_dtype).itemsize,
        const_bufs=1,
    )

    def run(single_buffer_consts):
        in_specs, out_spec = build_specs(single_buffer_consts)
        return pl.pallas_call(
            prenorm_kernel,
            out_shape=jax.ShapeDtypeStruct((rows_p, Hp), out_dtype),
            grid_spec=pltpu.PrefetchScalarGridSpec(
                num_scalar_prefetch=0,
                grid=(n_row, n_col),
                in_specs=in_specs,
                out_specs=out_spec,
                scratch_shapes=[pltpu.VMEM((tr, D), compute_dtype)],
            ),
            compiler_params=pltpu.CompilerParams(
                dimension_semantics=dims,
                vmem_limit_bytes=vmem_limit,
            ),
        )(x2, gamma2, beta2, wT, b2)

    try:
        out = run(True)
    except Exception:
        # Fallback for jax versions where Buffered(1) on constants is rejected.
        out = run(False)

    return out[:rows, :H].reshape(B, N, H)


def prenorm(x, gamma, beta, w, b, *, compute_dtype=None, out_dtype=None,
            tile_rows=512, tile_cols=1024):
    """Convenience wrapper.  In real use call prenorm_prepare() once and reuse
    the prepared params across forward calls (the transpose/cast/pad is a full
    D*H HBM round-trip)."""
    params = prenorm_prepare(gamma, beta, w, b, compute_dtype=compute_dtype)
    return prenorm_apply(x, params, out_dtype=out_dtype,
                         tile_rows=tile_rows, tile_cols=tile_cols)


def prenorm_ref(x, gamma, beta, w, b):
    """Pure-JAX reference matching PyTorch PreNorm(dim, nn.Linear(dim, dim))."""
    mean = jnp.mean(x, axis=-1, keepdims=True)
    var = jnp.mean((x - mean) ** 2, axis=-1, keepdims=True)
    normed = (x - mean) / jnp.sqrt(var + EPS) * gamma + beta
    return normed @ w.T + b


if __name__ == "__main__":
    key = jax.random.PRNGKey(0)
    B, N, D = 2, 8, 32  # batch, tokens, embedding dim

    k_x, k_w, k_b = jax.random.split(key, 3)
    x = jax.random.normal(k_x, (B, N, D), dtype=jnp.float32)

    # LayerNorm params (PyTorch init: weight=1, bias=0)
    gamma = jnp.ones((D,), dtype=jnp.float32)
    beta = jnp.zeros((D,), dtype=jnp.float32)

    # fn = Linear(dim, dim) params, PyTorch-style (out, in)
    w = jax.random.normal(k_w, (D, D), dtype=jnp.float32) * 0.05
    b = jax.random.normal(k_b, (D,), dtype=jnp.float32) * 0.05

    y = prenorm(x, gamma, beta, w, b)
    y = jax.block_until_ready(y)

    y_ref = prenorm_ref(x, gamma, beta, w, b)
    assert y.shape == (B, N, D)
    assert jnp.allclose(y, y_ref, atol=1e-5, rtol=1e-5), "mismatch vs reference"

    print("KERNEL_OK")
</pallas_src>

<mosaic_0001>
module attributes {stable_mosaic.version = 11 : i64} {
  func.func @prenorm_kernel(%arg0: i32, %arg1: i32, %arg2: memref<8x32xf32, #tpu.memory_space<vmem>>, %arg3: memref<1x32xf32, #tpu.memory_space<vmem>>, %arg4: memref<1x32xf32, #tpu.memory_space<vmem>>, %arg5: memref<32x128xf32, #tpu.memory_space<vmem>>, %arg6: memref<1x128xf32, #tpu.memory_space<vmem>>, %arg7: memref<8x128xf32, #tpu.memory_space<vmem>>, %arg8: memref<8x32xf32, #tpu.memory_space<vmem>>) attributes {dimension_semantics = [#tpu.dimension_semantics<parallel>, #tpu.dimension_semantics<parallel>], iteration_bounds = array<i64: 2, 1>, scalar_prefetch = 0 : i64, scratch_operands = 1 : i64, tpu.core_type = #tpu.core_type<tc>, window_params = [{transform_indices = @transform_0, window_bounds = array<i64: 8, 32>}, {pipeline_mode = #tpu.pipeline_mode<synchronous>, transform_indices = @transform_1, window_bounds = array<i64: 1, 32>}, {pipeline_mode = #tpu.pipeline_mode<synchronous>, transform_indices = @transform_2, window_bounds = array<i64: 1, 32>}, {pipeline_mode = #tpu.pipeline_mode<synchronous>, transform_indices = @transform_3, window_bounds = array<i64: 32, 128>}, {pipeline_mode = #tpu.pipeline_mode<synchronous>, transform_indices = @transform_4, window_bounds = array<i64: 1, 128>}, {transform_indices = @transform_5, window_bounds = array<i64: 8, 128>}]} {
    %c0_i32 = arith.constant 0 : i32
    %0 = arith.cmpi eq, %arg1, %c0_i32 : i32
    %1 = arith.extui %0 : i1 to i32
    %c0_i32_0 = arith.constant 0 : i32
    %2 = arith.cmpi ne, %1, %c0_i32_0 : i32
    scf.if %2 {
      %c0_8 = arith.constant 0 : index
      %c0_9 = arith.constant 0 : index
      %10 = vector.load %arg2[%c0_8, %c0_9] : memref<8x32xf32, #tpu.memory_space<vmem>>, vector<8x32xf32>
      %cst_10 = arith.constant dense<0.000000e+00> : vector<8xf32>
      %11 = vector.multi_reduction <add>, %10, %cst_10 [1] : vector<8x32xf32> to vector<8xf32>
      %12 = vector.shape_cast %11 : vector<8xf32> to vector<8x1xf32>
      %cst_11 = arith.constant 3.200000e+01 : f32
      %13 = vector.broadcast %cst_11 : f32 to vector<8x1xf32>
      %14 = arith.divf %12, %13 : vector<8x1xf32>
      %15 = vector.broadcast %14 : vector<8x1xf32> to vector<8x32xf32>
      %16 = arith.subf %10, %15 : vector<8x32xf32>
      %17 = arith.mulf %16, %16 : vector<8x32xf32>
      %cst_12 = arith.constant dense<0.000000e+00> : vector<8xf32>
      %18 = vector.multi_reduction <add>, %17, %cst_12 [1] : vector<8x32xf32> to vector<8xf32>
      %19 = vector.shape_cast %18 : vector<8xf32> to vector<8x1xf32>
      %cst_13 = arith.constant 3.200000e+01 : f32
      %20 = vector.broadcast %cst_13 : f32 to vector<8x1xf32>
      %21 = arith.divf %19, %20 : vector<8x1xf32>
      %cst_14 = arith.constant 9.99999974E-6 : f32
      %22 = vector.broadcast %cst_14 : f32 to vector<8x1xf32>
      %23 = arith.addf %21, %22 : vector<8x1xf32>
      %24 = math.rsqrt %23 : vector<8x1xf32>
      %25 = vector.broadcast %24 : vector<8x1xf32> to vector<8x32xf32>
      %26 = arith.mulf %16, %25 : vector<8x32xf32>
      %c0_15 = arith.constant 0 : index
      %c0_16 = arith.constant 0 : index
      %27 = vector.load %arg3[%c0_15, %c0_16] : memref<1x32xf32, #tpu.memory_space<vmem>>, vector<1x32xf32>
      %28 = vector.broadcast %27 : vector<1x32xf32> to vector<8x32xf32>
      %29 = arith.mulf %26, %28 : vector<8x32xf32>
      %c0_17 = arith.constant 0 : index
      %c0_18 = arith.constant 0 : index
      %30 = vector.load %arg4[%c0_17, %c0_18] : memref<1x32xf32, #tpu.memory_space<vmem>>, vector<1x32xf32>
      %31 = vector.broadcast %30 : vector<1x32xf32> to vector<8x32xf32>
      %32 = arith.addf %29, %31 : vector<8x32xf32>
      %c0_19 = arith.constant 0 : index
      %c0_20 = arith.constant 0 : index
      %33 = vector.load %arg8[%c0_19, %c0_20] : memref<8x32xf32, #tpu.memory_space<vmem>>, vector<8x32xf32>
      tpu.vector_store %arg8[%c0_19, %c0_20], %32 {strides = array<i32>} : memref<8x32xf32, #tpu.memory_space<vmem>>, vector<8x32xf32>,
    } else {
    }
    %c0 = arith.constant 0 : index
    %c0_1 = arith.constant 0 : index
    %3 = vector.load %arg8[%c0, %c0_1] : memref<8x32xf32, #tpu.memory_space<vmem>>, vector<8x32xf32>
    %c0_2 = arith.constant 0 : index
    %c0_3 = arith.constant 0 : index
    %4 = vector.load %arg5[%c0_2, %c0_3] : memref<32x128xf32, #tpu.memory_space<vmem>>, vector<32x128xf32>
    %cst = arith.constant dense<0.000000e+00> : vector<8x128xf32>
    %5 = tpu.matmul %3, %4, %cst {dimension_numbers = #tpu.dot_dimension_numbers<[1], [0], [0], [1], [0, 0, 1, 1], [], []>} : vector<8x32xf32>, vector<32x128xf32>, vector<8x128xf32> -> vector<8x128xf32>
    %c0_4 = arith.constant 0 : index
    %c0_5 = arith.constant 0 : index
    %6 = vector.load %arg6[%c0_4, %c0_5] : memref<1x128xf32, #tpu.memory_space<vmem>>, vector<1x128xf32>
    %7 = vector.broadcast %6 : vector<1x128xf32> to vector<8x128xf32>
    %8 = arith.addf %5, %7 : vector<8x128xf32>
    %c0_6 = arith.constant 0 : index
    %c0_7 = arith.constant 0 : index
    %9 = vector.load %arg7[%c0_6, %c0_7] : memref<8x128xf32, #tpu.memory_space<vmem>>, vector<8x128xf32>
    tpu.vector_store %arg7[%c0_6, %c0_7], %8 {strides = array<i32>} : memref<8x128xf32, #tpu.memory_space<vmem>>, vector<8x128xf32>,
    return
  }
  func.func @transform_0(%arg0: i32, %arg1: i32) -> (i32, i32) {
    %c0_i32 = arith.constant 0 : i32
    %c0_i32_0 = arith.constant 0 : i32
    return %arg0, %c0_i32 : i32, i32
  }
  func.func @transform_1(%arg0: i32, %arg1: i32) -> (i32, i32) {
    %c0_i32 = arith.constant 0 : i32
    %c0_i32_0 = arith.constant 0 : i32
    %c0_i32_1 = arith.constant 0 : i32
    return %c0_i32, %c0_i32_0 : i32, i32
  }
  func.func @transform_2(%arg0: i32, %arg1: i32) -> (i32, i32) {
    %c0_i32 = arith.constant 0 : i32
    %c0_i32_0 = arith.constant 0 : i32
    %c0_i32_1 = arith.constant 0 : i32
    return %c0_i32, %c0_i32_0 : i32, i32
  }
  func.func @transform_3(%arg0: i32, %arg1: i32) -> (i32, i32) {
    %c0_i32 = arith.constant 0 : i32
    %c0_i32_0 = arith.constant 0 : i32
    return %c0_i32, %arg1 : i32, i32
  }
  func.func @transform_4(%arg0: i32, %arg1: i32) -> (i32, i32) {
    %c0_i32 = arith.constant 0 : i32
    %c0_i32_0 = arith.constant 0 : i32
    return %c0_i32, %arg1 : i32, i32
  }
  func.func @transform_5(%arg0: i32, %arg1: i32) -> (i32, i32) {
    %c0_i32 = arith.constant 0 : i32
    return %arg0, %arg1 : i32, i32
  }
}

module attributes {stable_mosaic.version = 11 : i64} {
  func.func @prenorm_kernel(%arg0: i32, %arg1: i32, %arg2: memref<8x32xf32, #tpu.memory_space<vmem>>, %arg3: memref<1x32xf32, #tpu.memory_space<vmem>>, %arg4: memref<1x32xf32, #tpu.memory_space<vmem>>, %arg5: memref<32x128xf32, #tpu.memory_space<vmem>>, %arg6: memref<1x128xf32, #tpu.memory_space<vmem>>, %arg7: memref<8x128xf32, #tpu.memory_space<vmem>>, %arg8: memref<8x32xf32, #tpu.memory_space<vmem>>) attributes {dimension_semantics = [#tpu.dimension_semantics<parallel>, #tpu.dimension_semantics<parallel>], iteration_bounds = array<i64: 2, 1>, scalar_prefetch = 0 : i64, scratch_operands = 1 : i64, tpu.core_type = #tpu.core_type<tc>, window_params = [{transform_indices = @transform_0, window_bounds = array<i64: 8, 32>}, {pipeline_mode = #tpu.pipeline_mode<synchronous>, transform_indices = @transform_1, window_bounds = array<i64: 1, 32>}, {pipeline_mode = #tpu.pipeline_mode<synchronous>, transform_indices = @transform_2, window_bounds = array<i64: 1, 32>}, {transform_indices = @transform_3, window_bounds = array<i64: 32, 128>}, {transform_indices = @transform_4, window_bounds = array<i64: 1, 128>}, {transform_indices = @transform_5, window_bounds = array<i64: 8, 128>}]} {
    %c0_i32 = arith.constant 0 : i32
    %0 = arith.cmpi eq, %arg1, %c0_i32 : i32
    %1 = arith.extui %0 : i1 to i32
    %c0_i32_0 = arith.constant 0 : i32
    %2 = arith.cmpi ne, %1, %c0_i32_0 : i32
    scf.if %2 {
      %c0_8 = arith.constant 0 : index
      %c0_9 = arith.constant 0 : index
      %10 = vector.load %arg2[%c0_8, %c0_9] : memref<8x32xf32, #tpu.memory_space<vmem>>, vector<8x32xf32>
      %cst_10 = arith.constant dense<0.000000e+00> : vector<8xf32>
      %11 = vector.multi_reduction <add>, %10, %cst_10 [1] : vector<8x32xf32> to vector<8xf32>
      %12 = vector.shape_cast %11 : vector<8xf32> to vector<8x1xf32>
      %cst_11 = arith.constant 3.200000e+01 : f32
      %13 = vector.broadcast %cst_11 : f32 to vector<8x1xf32>
      %14 = arith.divf %12, %13 : vector<8x1xf32>
      %15 = vector.broadcast %14 : vector<8x1xf32> to vector<8x32xf32>
      %16 = arith.subf %10, %15 : vector<8x32xf32>
      %17 = arith.mulf %16, %16 : vector<8x32xf32>
      %cst_12 = arith.constant dense<0.000000e+00> : vector<8xf32>
      %18 = vector.multi_reduction <add>, %17, %cst_12 [1] : vector<8x32xf32> to vector<8xf32>
      %19 = vector.shape_cast %18 : vector<8xf32> to vector<8x1xf32>
      %cst_13 = arith.constant 3.200000e+01 : f32
      %20 = vector.broadcast %cst_13 : f32 to vector<8x1xf32>
      %21 = arith.divf %19, %20 : vector<8x1xf32>
      %cst_14 = arith.constant 9.99999974E-6 : f32
      %22 = vector.broadcast %cst_14 : f32 to vector<8x1xf32>
      %23 = arith.addf %21, %22 : vector<8x1xf32>
      %24 = math.rsqrt %23 : vector<8x1xf32>
      %25 = vector.broadcast %24 : vector<8x1xf32> to vector<8x32xf32>
      %26 = arith.mulf %16, %25 : vector<8x32xf32>
      %c0_15 = arith.constant 0 : index
      %c0_16 = arith.constant 0 : index
      %27 = vector.load %arg3[%c0_15, %c0_16] : memref<1x32xf32, #tpu.memory_space<vmem>>, vector<1x32xf32>
      %28 = vector.broadcast %27 : vector<1x32xf32> to vector<8x32xf32>
      %29 = arith.mulf %26, %28 : vector<8x32xf32>
      %c0_17 = arith.constant 0 : index
      %c0_18 = arith.constant 0 : index
      %30 = vector.load %arg4[%c0_17, %c0_18] : memref<1x32xf32, #tpu.memory_space<vmem>>, vector<1x32xf32>
      %31 = vector.broadcast %30 : vector<1x32xf32> to vector<8x32xf32>
      %32 = arith.addf %29, %31 : vector<8x32xf32>
      %c0_19 = arith.constant 0 : index
      %c0_20 = arith.constant 0 : index
      %33 = vector.load %arg8[%c0_19, %c0_20] : memref<8x32xf32, #tpu.memory_space<vmem>>, vector<8x32xf32>
      tpu.vector_store %arg8[%c0_19, %c0_20], %32 {strides = array<i32>} : memref<8x32xf32, #tpu.memory_space<vmem>>, vector<8x32xf32>,
    } else {
    }
    %c0 = arith.constant 0 : index
    %c0_1 = arith.constant 0 : index
    %3 = vector.load %arg8[%c0, %c0_1] : memref<8x32xf32, #tpu.memory_space<vmem>>, vector<8x32xf32>
    %c0_2 = arith.constant 0 : index
    %c0_3 = arith.constant 0 : index
    %4 = vector.load %arg5[%c0_2, %c0_3] : memref<32x128xf32, #tpu.memory_space<vmem>>, vector<32x128xf32>
    %cst = arith.constant dense<0.000000e+00> : vector<8x128xf32>
    %5 = tpu.matmul %3, %4, %cst {dimension_numbers = #tpu.dot_dimension_numbers<[1], [0], [0], [1], [0, 0, 1, 1], [], []>} : vector<8x32xf32>, vector<32x128xf32>, vector<8x128xf32> -> vector<8x128xf32>
    %c0_4 = arith.constant 0 : index
    %c0_5 = arith.constant 0 : index
    %6 = vector.load %arg6[%c0_4, %c0_5] : memref<1x128xf32, #tpu.memory_space<vmem>>, vector<1x128xf32>
    %7 = vector.broadcast %6 : vector<1x128xf32> to vector<8x128xf32>
    %8 = arith.addf %5, %7 : vector<8x128xf32>
    %c0_6 = arith.constant 0 : index
    %c0_7 = arith.constant 0 : index
    %9 = vector.load %arg7[%c0_6, %c0_7] : memref<8x128xf32, #tpu.memory_space<vmem>>, vector<8x128xf32>
    tpu.vector_store %arg7[%c0_6, %c0_7], %8 {strides = array<i32>} : memref<8x128xf32, #tpu.memory_space<vmem>>, vector<8x128xf32>,
    return
  }
  func.func @transform_0(%arg0: i32, %arg1: i32) -> (i32, i32) {
    %c0_i32 = arith.constant 0 : i32
    %c0_i32_0 = arith.constant 0 : i32
    return %arg0, %c0_i32 : i32, i32
  }
  func.func @transform_1(%arg0: i32, %arg1: i32) -> (i32, i32) {
    %c0_i32 = arith.constant 0 : i32
    %c0_i32_0 = arith.constant 0 : i32
    %c0_i32_1 = arith.constant 0 : i32
    return %c0_i32, %c0_i32_0 : i32, i32
  }
  func.func @transform_2(%arg0: i32, %arg1: i32) -> (i32, i32) {
    %c0_i32 = arith.constant 0 : i32
    %c0_i32_0 = arith.constant 0 : i32
    %c0_i32_1 = arith.constant 0 : i32
    return %c0_i32, %c0_i32_0 : i32, i32
  }
  func.func @transform_3(%arg0: i32, %arg1: i32) -> (i32, i32) {
    %c0_i32 = arith.constant 0 : i32
    %c0_i32_0 = arith.constant 0 : i32
    return %c0_i32, %arg1 : i32, i32
  }
  func.func @transform_4(%arg0: i32, %arg1: i32) -> (i32, i32) {
    %c0_i32 = arith.constant 0 : i32
    %c0_i32_0 = arith.constant 0 : i32
    return %c0_i32, %arg1 : i32, i32
  }
  func.func @transform_5(%arg0: i32, %arg1: i32) -> (i32, i32) {
    %c0_i32 = arith.constant 0 : i32
    return %arg0, %arg1 : i32, i32
  }
}

</mosaic_0001>

<llo_original>
// kernel: tpu_custom_call.1
$region0: #{tpu_custom_call.1}
  #allocation0 [shape = 'u32[]', space=smem, size = 0x4, offset = 0x4, fixed_abs, tag = 'smem constant byte address 0x4 - core index']
  #allocation1 [shape = 'u32[144,128]{1,0:T(1,128)}', space=vmem, size = 0x12000, scoped, tag = 'internal scratch']
  #allocation2 [shape = 'f32[8,32]{1,0:T(8,128)}', space=vmem, size = 0x1000, scoped, tag = 'scratch operand']
  %s0 = inlined_call_operand.hbm [shape: f32[16,32], index: 0, kind: input, shape index: {}]
  %s1 = inlined_call_operand.vmem [shape: f32[1,32], index: 1, kind: input, shape index: {}]
  %s2 = inlined_call_operand.vmem [shape: f32[1,32], index: 2, kind: input, shape index: {}]
  %s3 = inlined_call_operand.hbm [shape: f32[32,128], index: 3, kind: input, shape index: {}]
  %s4 = inlined_call_operand.vmem [shape: f32[1,128], index: 4, kind: input, shape index: {}]
  %s5 = inlined_call_operand.hbm [shape: f32[16,128], index: 5, kind: output, shape index: {}]
  %s6 = sld [smem:[#allocation0]]
  $region65: #{tpu_custom_call.1} parent=0
    _
  %s8 = ssub.s32 1, %s6
  %s9 = scalar_select 0, %s8, %s6
  $region1: #{tpu_custom_call.1} parent=0
    #allocation3 [shape = 'u8[8192]{0}', space=vmem, size = 0x2000, scoped, tag = 'input window, operand 0']
    #allocation4 [shape = 's32[2]{0}', space=sflag, size = 0x8, scoped, tag = 'scoped memory for tpu_custom_call.1']
    #allocation5 [shape = 's32[2]{0}', space=sflag, size = 0x8, scoped, tag = 'scoped memory for tpu_custom_call.1']
    #allocation6 [shape = 'u8[16384]{0}', space=vmem, size = 0x4000, scoped, tag = 'input window, operand 3, single buffered']
    #allocation7 [shape = 's32[1]{0}', space=sflag, size = 0x4, scoped, tag = 'scoped memory for tpu_custom_call.1']
    #allocation8 [shape = 'u8[8192]{0}', space=vmem, size = 0x2000, scoped, tag = 'output window, operand 0']
    %10 = vsyncpa [#allocation4], 0
    %s11 = scalar_lea.sflag [#allocation4], 1
    %12 = vsyncpa %s11, 0
    %13 = vsyncpa [#allocation7], 0
    %14 = vsyncpa [#allocation5], 0
    %s15 = scalar_lea.sflag [#allocation5], 1
    %16 = vsyncpa %s15, 0
    loop: start=0, step=1, limit=4
    $region2: #{tpu_custom_call.1} parent=1 // loop_pre_header
      _
    $region3: #{tpu_custom_call.1} parent=1 // loop_header
      %s18 = sphi 0, %s22
      %p19 = scmp.ge.s32.totalorder %s18, 4
      %s25 = sphi 0, %s37
      %s26 = sphi 0, %s33
      %s27 = sphi 0, %s25
      %s28 = sphi 0, %s26
      %s29 = sphi 0, %s27
      %s30 = sphi 0, %s28
      %s40 = sphi 0, %s42
      %s43 = sphi 0, %s40
      %s44 = sphi 0, %s43
      %s60 = sphi 0, %s44
      %s64 = sphi 0, %s64
      %s66 = sphi 0, %s64
      %s67 = sphi 0, %s66
      %s81 = sphi 0, %s67
      %s85 = sphi 0, %s85
      %s87 = sphi 0, %s85
      %s88 = sphi 0, %s87
      %s102 = sphi 0, %s88
      %s108 = sphi 0, %s110
      %s111 = sphi 0, %s108
      %s112 = sphi 0, %s111
      %s128 = sphi 0, %s112
      %s134 = sphi 0, %s136
      %s137 = sphi 0, %s134
      %s138 = sphi 0, %s137
      %s154 = sphi 0, %s138
      %s162 = sphi 0, %s164
      %s165 = sphi 0, %s162
      %s166 = sphi 0, %s165
      %s182 = sphi 0, %s166
    $region4: #{tpu_custom_call.1} parent=1 // loop_header_branch
      %21 = sbr.rel (%p19) target = $region8
    $region5: #{tpu_custom_call.1} parent=1 // loop_body
      %s23 = ssub.s32 %s18, 1
      %s24 = ssub.s32 %s18, 2
      %s31 = sadd.s32 1, %s26
      %p32 = scmp.ge.s32.totalorder %s31, 1
      %s33 = scalar_select %p32, 0, %s31
      %s34 = sadd.s32 1, %s25
      %s35 = scalar_select %p32, %s34, %s25
      %p36 = scmp.ge.s32.totalorder %s35, 2
      %s37 = scalar_select %p36, 0, %s35
      %s38 = ssub.s32 %s25, %s37
      %p39 = scmp.eq.s32.totalorder %s38, 0
      %s41 = sadd.s32 %s40, 1
      %s42 = scalar_select %p39, %s40, %s41
      %p45 = pneg %p39
      %p46 = scmp.eq.s32.totalorder %s18, 1
      %p47 = por %p45, %p46
      %p48 = scmp.ne.s32.totalorder %s40, %s43
      %p49 = scmp.eq.s32.totalorder %s18, 0
      %p50 = por %p48, %p49
      %p51 = scmp.ne.s32.totalorder %s40, %s43
      %p52 = scmp.eq.s32.totalorder %s23, 1
      %p53 = por %p51, %p52
      %p54 = scmp.ne.s32.totalorder %s43, %s44
      %p55 = scmp.eq.s32.totalorder %s23, 0
      %p56 = por %p54, %p55
      %p57 = scmp.ne.s32.totalorder %s43, %s44
      %p58 = scmp.eq.s32.totalorder %s24, 1
      %p59 = por %p57, %p58
      %p61 = scmp.ne.s32.totalorder %s44, %s60
      %p62 = scmp.eq.s32.totalorder %s24, 0
      %p63 = por %p61, %p62
      %s65 = sadd.s32 %s64, 1
      %p68 = scmp.eq.s32.totalorder %s18, 1
      %p69 = scmp.ne.s32.totalorder %s64, %s66
      %p70 = scmp.eq.s32.totalorder %s18, 0
      %p71 = por %p69, %p70
      %p72 = scmp.ne.s32.totalorder %s64, %s66
      %p73 = scmp.eq.s32.totalorder %s23, 1
      %p74 = por %p72, %p73
      %p75 = scmp.ne.s32.totalorder %s66, %s67
      %p76 = scmp.eq.s32.totalorder %s23, 0
      %p77 = por %p75, %p76
      %p78 = scmp.ne.s32.totalorder %s66, %s67
      %p79 = scmp.eq.s32.totalorder %s24, 1
      %p80 = por %p78, %p79
      %p82 = scmp.ne.s32.totalorder %s67, %s81
      %p83 = scmp.eq.s32.totalorder %s24, 0
      %p84 = por %p82, %p83
      %s86 = sadd.s32 %s85, 1
      %p89 = scmp.eq.s32.totalorder %s18, 1
      %p90 = scmp.ne.s32.totalorder %s85, %s87
      %p91 = scmp.eq.s32.totalorder %s18, 0
      %p92 = por %p90, %p91
      %p93 = scmp.ne.s32.totalorder %s85, %s87
      %p94 = scmp.eq.s32.totalorder %s23, 1
      %p95 = por %p93, %p94
      %p96 = scmp.ne.s32.totalorder %s87, %s88
      %p97 = scmp.eq.s32.totalorder %s23, 0
      %p98 = por %p96, %p97
      %p99 = scmp.ne.s32.totalorder %s87, %s88
      %p100 = scmp.eq.s32.totalorder %s24, 1
      %p101 = por %p99, %p100
      %p103 = scmp.ne.s32.totalorder %s88, %s102
      %p104 = scmp.eq.s32.totalorder %s24, 0
      %p105 = por %p103, %p104
      %s106 = ssub.s32 %s26, %s33
      %p107 = scmp.eq.s32.totalorder %s106, 0
      %s109 = sadd.s32 %s108, 1
      %s110 = scalar_select %p107, %s108, %s109
      %p113 = pneg %p107
      %p114 = scmp.eq.s32.totalorder %s18, 1
      %p115 = por %p113, %p114
      %p116 = scmp.ne.s32.totalorder %s108, %s111
      %p117 = scmp.eq.s32.totalorder %s18, 0
      %p118 = por %p116, %p117
      %p119 = scmp.ne.s32.totalorder %s108, %s111
      %p120 = scmp.eq.s32.totalorder %s23, 1
      %p121 = por %p119, %p120
      %p122 = scmp.ne.s32.totalorder %s111, %s112
      %p123 = scmp.eq.s32.totalorder %s23, 0
      %p124 = por %p122, %p123
      %p125 = scmp.ne.s32.totalorder %s111, %s112
      %p126 = scmp.eq.s32.totalorder %s24, 1
      %p127 = por %p125, %p126
      %p129 = scmp.ne.s32.totalorder %s112, %s128
      %p130 = scmp.eq.s32.totalorder %s24, 0
      %p131 = por %p129, %p130
      %s132 = ssub.s32 %s26, %s33
      %p133 = scmp.eq.s32.totalorder %s132, 0
      %s135 = sadd.s32 %s134, 1
      %s136 = scalar_select %p133, %s134, %s135
      %p139 = pneg %p133
      %p140 = scmp.eq.s32.totalorder %s18, 1
      %p141 = por %p139, %p140
      %p142 = scmp.ne.s32.totalorder %s134, %s137
      %p143 = scmp.eq.s32.totalorder %s18, 0
      %p144 = por %p142, %p143
      %p145 = scmp.ne.s32.totalorder %s134, %s137
      %p146 = scmp.eq.s32.totalorder %s23, 1
      %p147 = por %p145, %p146
      %p148 = scmp.ne.s32.totalorder %s137, %s138
      %p149 = scmp.eq.s32.totalorder %s23, 0
      %p150 = por %p148, %p149
      %p151 = scmp.ne.s32.totalorder %s137, %s138
      %p152 = scmp.eq.s32.totalorder %s24, 1
      %p153 = por %p151, %p152
      %p155 = scmp.ne.s32.totalorder %s138, %s154
      %p156 = scmp.eq.s32.totalorder %s24, 0
      %p157 = por %p155, %p156
      %s158 = ssub.s32 %s25, %s37
      %s159 = ssub.s32 %s26, %s33
      %s160 = sor.u32 %s158, %s159
      %p161 = scmp.eq.s32.totalorder %s160, 0
      %s163 = sadd.s32 %s162, 1
      %s164 = scalar_select %p161, %s162, %s163
      %p167 = pneg %p161
      %p168 = scmp.eq.s32.totalorder %s18, 1
      %p169 = por %p167, %p168
      %p170 = scmp.ne.s32.totalorder %s162, %s165
      %p171 = scmp.eq.s32.totalorder %s18, 0
      %p172 = por %p170, %p171
      %p173 = scmp.ne.s32.totalorder %s162, %s165
      %p174 = scmp.eq.s32.totalorder %s23, 1
      %p175 = por %p173, %p174
      %p176 = scmp.ne.s32.totalorder %s165, %s166
      %p177 = scmp.eq.s32.totalorder %s23, 0
      %p178 = por %p176, %p177
      %p179 = scmp.ne.s32.totalorder %s165, %s166
      %p180 = scmp.eq.s32.totalorder %s24, 1
      %p181 = por %p179, %p180
      %p183 = scmp.ne.s32.totalorder %s166, %s182
      %p184 = scmp.eq.s32.totalorder %s24, 0
      %p185 = por %p183, %p184
      %p186 = scmp.le.s32.totalorder 1, %s18
      %p187 = scmp.lt.s32.totalorder %s18, 3
      %p188 = pnand %p186, %p187
      %p189 = pneg %p188
      // Predicated region
      $region9: #{tpu_custom_call.1} parent=5 // pred_check
        _
      $region10: #{tpu_custom_call.1} parent=5 // pred_check_branch
        %191 = sbr.rel (%p188) target = $region12
      $region11: #{tpu_custom_call.1} parent=5 // pred_region
        %s192 = ssub.s32 %s18, 1
        // Predicated region
        $region13: #{tpu_custom_call.1} parent=11 // pred_check
          %p193 = pneg %p77
        $region14: #{tpu_custom_call.1} parent=11 // pred_check_branch
          %195 = sbr.rel (%p193) target = $region16
        $region15: #{tpu_custom_call.1} parent=11 // pred_region
          _
        $region16: #{tpu_custom_call.1} parent=11 // pred_fallthru
          _
        // Predicated region
        $region17: #{tpu_custom_call.1} parent=11 // pred_check
          %p196 = pneg %p98
        $region18: #{tpu_custom_call.1} parent=11 // pred_check_branch
          %198 = sbr.rel (%p196) target = $region20
        $region19: #{tpu_custom_call.1} parent=11 // pred_region
          _
        $region20: #{tpu_custom_call.1} parent=11 // pred_fallthru
          _
        // Predicated region
        $region21: #{tpu_custom_call.1} parent=11 // pred_check
          %p199 = pneg %p124
        $region22: #{tpu_custom_call.1} parent=11 // pred_check_branch
          %201 = sbr.rel (%p199) target = $region24
        $region23: #{tpu_custom_call.1} parent=11 // pred_region
          %s203 = ssub.s32 512, 512
          %204 = vsyncadd [#allocation7], %s203
          %s205 = smul.addr %s28, 128
          %s206 = scalar_lea.hbm %s3, %s205
          %s207 = sshll.u32 [#allocation6], 4
          %s208 = int_to_ptr.vmem [resolvable:$true] %s207
          %213 = dma.hbm_to_vmem [thread:$0]  %s206, 512, %s208, [#allocation7], 128, 128, 8
        $region24: #{tpu_custom_call.1} parent=11 // pred_fallthru
          _
        // Predicated region
        $region25: #{tpu_custom_call.1} parent=11 // pred_check
          %p214 = pneg %p150
        $region26: #{tpu_custom_call.1} parent=11 // pred_check_branch
          %216 = sbr.rel (%p214) target = $region28
        $region27: #{tpu_custom_call.1} parent=11 // pred_region
          %p217 = scmp.lt.s32.totalorder %s28, 0
          %s218 = scalar_select %p217, %s28, 0
          %s219 = scalar_lea.vmem %s4, %s218
        $region28: #{tpu_custom_call.1} parent=11 // pred_fallthru
          _
      $region12: #{tpu_custom_call.1} parent=5 // pred_fallthru
        _
      %p220 = scmp.lt.s32.totalorder %s18, 2
      // Predicated region
      $region29: #{tpu_custom_call.1} parent=5 // pred_check
        %p221 = pneg %p220
      $region30: #{tpu_custom_call.1} parent=5 // pred_check_branch
        %223 = sbr.rel (%p221) target = $region32
      $region31: #{tpu_custom_call.1} parent=5 // pred_region
        // Predicated region
        $region33: #{tpu_custom_call.1} parent=31 // pred_check
          %p224 = pneg %p50
        $region34: #{tpu_custom_call.1} parent=31 // pred_check_branch
          %226 = sbr.rel (%p224) target = $region36
        $region35: #{tpu_custom_call.1} parent=31 // pred_region
          %s227 = sand.u32 %s40, 1
          %s228 = scalar_lea.sflag [#allocation4], %s227
          %s229 = sand.u32 %s40, 1
          %s230 = smul.addr %s229, 8
          %s231 = scalar_lea.vmem [#allocation3], %s230
          %s233 = ssub.s32 128, 128
          %234 = vsyncadd %s228, %s233
          %s235 = smul.addr %s25, 128
          %s236 = scalar_lea.hbm %s0, %s235
          %s238 = sshll.u32 %s231, 4
          %s239 = int_to_ptr.vmem [resolvable:$true] %s238
          %241 = dma.hbm_to_vmem [thread:$0]  %s236, 128, %s239, %s228
        $region36: #{tpu_custom_call.1} parent=31 // pred_fallthru
          _
      $region32: #{tpu_custom_call.1} parent=5 // pred_fallthru
        _
      %p242 = scmp.le.s32.totalorder 1, %s18
      %p243 = scmp.lt.s32.totalorder %s18, 3
      %p244 = pnand %p242, %p243
      %p245 = pneg %p244
      // Predicated region
      $region37: #{tpu_custom_call.1} parent=5 // pred_check
        _
      $region38: #{tpu_custom_call.1} parent=5 // pred_check_branch
        %247 = sbr.rel (%p244) target = $region40
      $region39: #{tpu_custom_call.1} parent=5 // pred_region
        %s248 = ssub.s32 %s18, 1
        %s249 = sand.u32 %s43, 1
        %s250 = scalar_lea.sflag [#allocation4], %s249
        %s251 = sand.u32 %s43, 1
        %s252 = smul.addr %s251, 8
        %s253 = scalar_lea.vmem [#allocation3], %s252
        // Predicated region
        $region41: #{tpu_custom_call.1} parent=39 // pred_check
          %p254 = pneg %p56
        $region42: #{tpu_custom_call.1} parent=39 // pred_check_branch
          %256 = sbr.rel (%p254) target = $region44
        $region43: #{tpu_custom_call.1} parent=39 // pred_region
          %257 = dma.done %s250, 128
        $region44: #{tpu_custom_call.1} parent=39 // pred_fallthru
          _
        // Predicated region
        $region45: #{tpu_custom_call.1} parent=39 // pred_check
          %p258 = pneg %p124
        $region46: #{tpu_custom_call.1} parent=39 // pred_check_branch
          %260 = sbr.rel (%p258) target = $region48
        $region47: #{tpu_custom_call.1} parent=39 // pred_region
          %261 = dma.done [#allocation7], 512
        $region48: #{tpu_custom_call.1} parent=39 // pred_fallthru
          _
        %s262 = sand.u32 %s43, 1
        %s263 = scalar_lea.sflag [#allocation4], %s262
        %s264 = sand.u32 %s43, 1
        %s265 = smul.addr %s264, 8
        %s266 = scalar_lea.vmem [#allocation3], %s265
        %p267 = pneg %p56
        %p268 = pneg %p53
        %p269 = pneg %p77
        %p270 = pneg %p74
        %p271 = pneg %p98
        %p272 = pneg %p95
        %p273 = pneg %p124
        %p274 = pneg %p121
        %p275 = scmp.lt.s32.totalorder %s28, 0
        %s276 = scalar_select %p275, %s28, 0
        %s277 = scalar_lea.vmem %s4, %s276
        %p278 = pneg %p150
        %p279 = pneg %p147
        %p280 = pneg %p178
        %p281 = pneg %p175
        %s282 = sand.u32 %s165, 1
        %s283 = scalar_lea.sflag [#allocation5], %s282
        %s284 = sand.u32 %s165, 1
        %s285 = smul.addr %s284, 8
        %s286 = scalar_lea.vmem [#allocation8], %s285
        %p287 = scmp.lt.s32.totalorder %s28, 0
        %s288 = scalar_select %p287, %s28, 0
        %s289 = scalar_lea.vmem %s4, %s288
        %p290 = scmp.eq.s32.totalorder %s28, 0
        // Predicated region
        $region49: #{tpu_custom_call.1} parent=39 // pred_check
          %p291 = pneg %p290
        $region50: #{tpu_custom_call.1} parent=39 // pred_check_branch
          %293 = sbr.rel (%p291) target = $region52
        $region51: #{tpu_custom_call.1} parent=39 // pred_region
          %v294 = vld [vmem:[%s253] sm:$0xff]
          %vm295 = vcmask 261120
          %v296 = vsel %vm295, %v294, 0.0
          %297 = vadd.xlane.f32.xlu0 %v296
          %v298 = vpop.xlane.xlu0 %297
          %v299 = vrcp.pop 32.0
          %v300 = vmul.f32 %v298, %v299
          %v301 = vsub.f32 %v294, %v300
          %v302 = vmul.f32 %v301, %v301
          %v303 = vsel %vm295, %v302, 0.0
          %304 = vadd.xlane.f32.xlu0 %v303
          %v305 = vpop.xlane.xlu0 %304
          %v306 = vmul.f32 %v305, %v299
          %v307 = vadd.f32 %v306, 1e-05
          %v308 = vrsqrt.pop %v307
          %v309 = vmul.f32 %v301, %v308
          %v310 = vld [vmem:[%s1] sm:$0x1]
          %v312 = vlaneseq
          %v313 = vshrl.u32 %v312, 7
          %v314 = vsub.s32 0, %v313
          %v315 = vrot.slane %v310, %v314
          %v317 = vmul.f32 %v309, %v315
          %v318 = vld [vmem:[%s2] sm:$0x1]
          %v320 = vlaneseq
          %v321 = vshrl.u32 %v320, 7
          %v322 = vsub.s32 0, %v321
          %v323 = vrot.slane %v318, %v322
          %v325 = vadd.f32 %v317, %v323
          %326 = vst.msk [vmem:[#allocation2] sm:$0xff] %vm295, %v325
        $region52: #{tpu_custom_call.1} parent=39 // pred_fallthru
          _
        %v327 = vld [vmem:[#allocation2] sm:$0xff]
        %v328 = vld [vmem:[#allocation6] sm:$0xff]
        %v329 = vld [vmem:[#allocation6 + $0x8] sm:$0xff]
        %v330 = vld [vmem:[#allocation6 + $0x10] sm:$0xff]
        %v331 = vld [vmem:[#allocation6 + $0x18] sm:$0xff]
        %v332 = vld [vmem:[%s289] sm:$0x1]
        %v334 = vlaneseq
        %v335 = vshrl.u32 %v334, 7
        %v336 = vsub.s32 0, %v335
        %v337 = vrot.slane %v332, %v336
        %vm339 = vcmask 261120
        %v341 = vsel %vm339, %v327, 0
        %343 = vmatprep.subr.mxu0 0.0
        %344 = vmatpush1.msra.mxu0 0.0
        %345 = vmatprep.subr.mxu0 0.0
        %346 = vmatpush1.msra.mxu0 0.0
        %347 = vmatprep.subr.mxu0 0.0
        %348 = vmatpush1.msra.mxu0 0.0
        %349 = vmatprep.subr.mxu0 0.0
        %350 = vmatpush1.msra.mxu0 0.0
        %351 = vmatprep.subr.mxu0 0.0
        %352 = vmatpush1.msra.mxu0 0.0
        %353 = vmatprep.subr.mxu0 0.0
        %354 = vmatpush1.msra.mxu0 0.0
        %355 = vmatprep.subr.mxu0 0.0
        %356 = vmatpush1.msra.mxu0 0.0
        %357 = vmatprep.subr.mxu0 0.0
        %358 = vmatpush1.msra.mxu0 0.0
        %359 = vmatprep.subr.mxu0 0.0
        %360 = vmatpush1.msra.mxu0 0.0
        %361 = vmatprep.subr.mxu0 0.0
        %362 = vmatpush1.msra.mxu0 0.0
        %363 = vmatprep.subr.mxu0 0.0
        %364 = vmatpush1.msra.mxu0 0.0
        %365 = vmatprep.subr.mxu0 0.0
        %366 = vmatpush1.msra.mxu0 0.0
        %367 = vmatprep.subr.mxu0 0.0
        %368 = vmatpush1.msra.mxu0 %v331
        %369 = vmatprep.subr.mxu0 0.0
        %370 = vmatpush1.msra.mxu0 %v330
        %371 = vmatprep.subr.mxu0 0.0
        %372 = vmatpush1.msra.mxu0 %v329
        %373 = vmatprep.subr.mxu0 0.0
        %374 = vmatpush1.msra.mxu0 %v328
        %375 = vmatprep.subr.mxu0 0.0
        %376 = vmatpush2.msra.mxu0 0.0
        %377 = vmatprep.subr.mxu0 0.0
        %378 = vmatpush2.msra.mxu0 0.0
        %379 = vmatprep.subr.mxu0 0.0
        %380 = vmatpush2.msra.mxu0 0.0
        %381 = vmatprep.subr.mxu0 0.0
        %382 = vmatpush2.msra.mxu0 0.0
        %383 = vmatprep.subr.mxu0 0.0
        %384 = vmatpush2.msra.mxu0 0.0
        %385 = vmatprep.subr.mxu0 0.0
        %386 = vmatpush2.msra.mxu0 0.0
        %387 = vmatprep.subr.mxu0 0.0
        %388 = vmatpush2.msra.mxu0 0.0
        %389 = vmatprep.subr.mxu0 0.0
        %390 = vmatpush2.msra.mxu0 0.0
        %391 = vmatprep.subr.mxu0 0.0
        %392 = vmatpush2.msra.mxu0 0.0
        %393 = vmatprep.subr.mxu0 0.0
        %394 = vmatpush2.msra.mxu0 0.0
        %395 = vmatprep.subr.mxu0 0.0
        %396 = vmatpush2.msra.mxu0 0.0
        %397 = vmatprep.subr.mxu0 0.0
        %398 = vmatpush2.msra.mxu0 0.0
        %399 = vmatprep.subr.mxu0 0.0
        %400 = vmatpush2.msra.mxu0 0.0
        %401 = vmatprep.subr.mxu0 0.0
        %402 = vmatpush2.msra.mxu0 0.0
        %403 = vmatprep.subr.mxu0 0.0
        %404 = vmatpush2.msra.mxu0 0.0
        %405 = vmatprep.subr.mxu0 0.0
        %406 = vmatpush2.msra.mxu0 0.0
        %407 = vmatprep.mubr.f32.mxu0 0.0
        %408 = vmatmul.mubr.f32.gmra.mxu0 %v341
        %v409 = vpop.f32.mrf.mxu0
        %v410 = vadd.f32 %v337, %v409
        %v411 = vpop.f32.mrf.mxu0
        %412 = vdwg.mxu0
        %413 = vst [vmem:[%s286] sm:$0xff] %v410
        %s414 = sand.u32 %s165, 1
        %s415 = scalar_lea.sflag [#allocation5], %s414
        %s416 = sand.u32 %s165, 1
        %s417 = smul.addr %s416, 8
        %s418 = scalar_lea.vmem [#allocation8], %s417
        // Predicated region
        $region53: #{tpu_custom_call.1} parent=39 // pred_check
          %p419 = pneg %p175
        $region54: #{tpu_custom_call.1} parent=39 // pred_check_branch
          %421 = sbr.rel (%p419) target = $region56
        $region55: #{tpu_custom_call.1} parent=39 // pred_region
          %s423 = ssub.s32 128, 128
          %424 = vsyncadd %s415, %s423
          %s425 = sadd.s32 %s28, %s27
          %s426 = smul.addr %s425, 128
          %s427 = scalar_lea.hbm %s5, %s426
          %s429 = sshll.u32 %s418, 4
          %s430 = int_to_ptr.vmem [resolvable:$true] %s429
          %432 = dma.vmem_to_hbm [thread:$0]  %s430, 128, %s427, %s415
        $region56: #{tpu_custom_call.1} parent=39 // pred_fallthru
          _
      $region40: #{tpu_custom_call.1} parent=5 // pred_fallthru
        _
      %p433 = scmp.le.s32.totalorder 2, %s18
      // Predicated region
      $region57: #{tpu_custom_call.1} parent=5 // pred_check
        %p434 = pneg %p433
      $region58: #{tpu_custom_call.1} parent=5 // pred_check_branch
        %436 = sbr.rel (%p434) target = $region60
      $region59: #{tpu_custom_call.1} parent=5 // pred_region
        %s437 = ssub.s32 %s18, 2
        // Predicated region
        $region61: #{tpu_custom_call.1} parent=59 // pred_check
          %p438 = pneg %p181
        $region62: #{tpu_custom_call.1} parent=59 // pred_check_branch
          %440 = sbr.rel (%p438) target = $region64
        $region63: #{tpu_custom_call.1} parent=59 // pred_region
          %s441 = sand.u32 %s166, 1
          %s442 = scalar_lea.sflag [#allocation5], %s441
          %s443 = sand.u32 %s166, 1
          %s444 = smul.addr %s443, 8
          %s445 = scalar_lea.vmem [#allocation8], %s444
          %446 = dma.done %s442, 128
        $region64: #{tpu_custom_call.1} parent=59 // pred_fallthru
          _
      $region60: #{tpu_custom_call.1} parent=5 // pred_fallthru
        _
    $region6: #{tpu_custom_call.1} parent=1 // loop_footer
      %s22 = sadd.s32 1, %s18
    $region7: #{tpu_custom_call.1} parent=1 // loop_footer_branch
      %17 = sbr.rel target = $region3
    $region8: #{tpu_custom_call.1} parent=1 // loop_exit
      _
    %447 = vsyncpa [#allocation4], 1
    %s448 = scalar_lea.sflag [#allocation4], 1
    %449 = vsyncpa %s448, 1
    %450 = vsyncpa [#allocation7], 1
    %451 = vsyncpa [#allocation5], 1
    %s452 = scalar_lea.sflag [#allocation5], 1
    %453 = vsyncpa %s452, 1

// kernel: tpu_custom_call.1
$region0: #{tpu_custom_call.1}
  #allocation0 [shape = 'u32[]', space=smem, size = 0x4, offset = 0x4, fixed_abs, tag = 'smem constant byte address 0x4 - core index']
  #allocation1 [shape = 'u32[144,128]{1,0:T(1,128)}', space=vmem, size = 0x12000, scoped, tag = 'internal scratch']
  #allocation2 [shape = 'f32[8,32]{1,0:T(8,128)}', space=vmem, size = 0x1000, scoped, tag = 'scratch operand']
  %s0 = inlined_call_operand.hbm [shape: f32[16,32], index: 0, kind: input, shape index: {}]
  %s1 = inlined_call_operand.vmem [shape: f32[1,32], index: 1, kind: input, shape index: {}]
  %s2 = inlined_call_operand.vmem [shape: f32[1,32], index: 2, kind: input, shape index: {}]
  %s3 = inlined_call_operand.hbm [shape: f32[32,128], index: 3, kind: input, shape index: {}]
  %s4 = inlined_call_operand.vmem [shape: f32[1,128], index: 4, kind: input, shape index: {}]
  %s5 = inlined_call_operand.hbm [shape: f32[16,128], index: 5, kind: output, shape index: {}]
  %s6 = sld [smem:[#allocation0]]
  $region65: #{tpu_custom_call.1} parent=0
    _
  %s8 = ssub.s32 1, %s6
  %s9 = scalar_select 0, %s8, %s6
  $region1: #{tpu_custom_call.1} parent=0
    #allocation3 [shape = 'u8[8192]{0}', space=vmem, size = 0x2000, scoped, tag = 'input window, operand 0']
    #allocation4 [shape = 's32[2]{0}', space=sflag, size = 0x8, scoped, tag = 'scoped memory for tpu_custom_call.1']
    #allocation5 [shape = 's32[2]{0}', space=sflag, size = 0x8, scoped, tag = 'scoped memory for tpu_custom_call.1']
    #allocation6 [shape = 'u8[16384]{0}', space=vmem, size = 0x4000, scoped, tag = 'input window, operand 3, single buffered']
    #allocation7 [shape = 's32[1]{0}', space=sflag, size = 0x4, scoped, tag = 'scoped memory for tpu_custom_call.1']
    #allocation8 [shape = 'u8[8192]{0}', space=vmem, size = 0x2000, scoped, tag = 'output window, operand 0']
    %10 = vsyncpa [#allocation4], 0
    %s11 = scalar_lea.sflag [#allocation4], 1
    %12 = vsyncpa %s11, 0
    %13 = vsyncpa [#allocation7], 0
    %14 = vsyncpa [#allocation5], 0
    %s15 = scalar_lea.sflag [#allocation5], 1
    %16 = vsyncpa %s15, 0
    loop: start=0, step=1, limit=4
    $region2: #{tpu_custom_call.1} parent=1 // loop_pre_header
      _
    $region3: #{tpu_custom_call.1} parent=1 // loop_header
      %s18 = sphi 0, %s22
      %p19 = scmp.ge.s32.totalorder %s18, 4
      %s25 = sphi 0, %s37
      %s26 = sphi 0, %s33
      %s27 = sphi 0, %s25
      %s28 = sphi 0, %s26
      %s29 = sphi 0, %s27
      %s30 = sphi 0, %s28
      %s40 = sphi 0, %s42
      %s43 = sphi 0, %s40
      %s44 = sphi 0, %s43
      %s60 = sphi 0, %s44
      %s64 = sphi 0, %s64
      %s66 = sphi 0, %s64
      %s67 = sphi 0, %s66
      %s81 = sphi 0, %s67
      %s85 = sphi 0, %s85
      %s87 = sphi 0, %s85
      %s88 = sphi 0, %s87
      %s102 = sphi 0, %s88
      %s108 = sphi 0, %s110
      %s111 = sphi 0, %s108
      %s112 = sphi 0, %s111
      %s128 = sphi 0, %s112
      %s134 = sphi 0, %s136
      %s137 = sphi 0, %s134
      %s138 = sphi 0, %s137
      %s154 = sphi 0, %s138
      %s162 = sphi 0, %s164
      %s165 = sphi 0, %s162
      %s166 = sphi 0, %s165
      %s182 = sphi 0, %s166
    $region4: #{tpu_custom_call.1} parent=1 // loop_header_branch
      %21 = sbr.rel (%p19) target = $region8
    $region5: #{tpu_custom_call.1} parent=1 // loop_body
      %s23 = ssub.s32 %s18, 1
      %s24 = ssub.s32 %s18, 2
      %s31 = sadd.s32 1, %s26
      %p32 = scmp.ge.s32.totalorder %s31, 1
      %s33 = scalar_select %p32, 0, %s31
      %s34 = sadd.s32 1, %s25
      %s35 = scalar_select %p32, %s34, %s25
      %p36 = scmp.ge.s32.totalorder %s35, 2
      %s37 = scalar_select %p36, 0, %s35
      %s38 = ssub.s32 %s25, %s37
      %p39 = scmp.eq.s32.totalorder %s38, 0
      %s41 = sadd.s32 %s40, 1
      %s42 = scalar_select %p39, %s40, %s41
      %p45 = pneg %p39
      %p46 = scmp.eq.s32.totalorder %s18, 1
      %p47 = por %p45, %p46
      %p48 = scmp.ne.s32.totalorder %s40, %s43
      %p49 = scmp.eq.s32.totalorder %s18, 0
      %p50 = por %p48, %p49
      %p51 = scmp.ne.s32.totalorder %s40, %s43
      %p52 = scmp.eq.s32.totalorder %s23, 1
      %p53 = por %p51, %p52
      %p54 = scmp.ne.s32.totalorder %s43, %s44
      %p55 = scmp.eq.s32.totalorder %s23, 0
      %p56 = por %p54, %p55
      %p57 = scmp.ne.s32.totalorder %s43, %s44
      %p58 = scmp.eq.s32.totalorder %s24, 1
      %p59 = por %p57, %p58
      %p61 = scmp.ne.s32.totalorder %s44, %s60
      %p62 = scmp.eq.s32.totalorder %s24, 0
      %p63 = por %p61, %p62
      %s65 = sadd.s32 %s64, 1
      %p68 = scmp.eq.s32.totalorder %s18, 1
      %p69 = scmp.ne.s32.totalorder %s64, %s66
      %p70 = scmp.eq.s32.totalorder %s18, 0
      %p71 = por %p69, %p70
      %p72 = scmp.ne.s32.totalorder %s64, %s66
      %p73 = scmp.eq.s32.totalorder %s23, 1
      %p74 = por %p72, %p73
      %p75 = scmp.ne.s32.totalorder %s66, %s67
      %p76 = scmp.eq.s32.totalorder %s23, 0
      %p77 = por %p75, %p76
      %p78 = scmp.ne.s32.totalorder %s66, %s67
      %p79 = scmp.eq.s32.totalorder %s24, 1
      %p80 = por %p78, %p79
      %p82 = scmp.ne.s32.totalorder %s67, %s81
      %p83 = scmp.eq.s32.totalorder %s24, 0
      %p84 = por %p82, %p83
      %s86 = sadd.s32 %s85, 1
      %p89 = scmp.eq.s32.totalorder %s18, 1
      %p90 = scmp.ne.s32.totalorder %s85, %s87
      %p91 = scmp.eq.s32.totalorder %s18, 0
      %p92 = por %p90, %p91
      %p93 = scmp.ne.s32.totalorder %s85, %s87
      %p94 = scmp.eq.s32.totalorder %s23, 1
      %p95 = por %p93, %p94
      %p96 = scmp.ne.s32.totalorder %s87, %s88
      %p97 = scmp.eq.s32.totalorder %s23, 0
      %p98 = por %p96, %p97
      %p99 = scmp.ne.s32.totalorder %s87, %s88
      %p100 = scmp.eq.s32.totalorder %s24, 1
      %p101 = por %p99, %p100
      %p103 = scmp.ne.s32.totalorder %s88, %s102
      %p104 = scmp.eq.s32.totalorder %s24, 0
      %p105 = por %p103, %p104
      %s106 = ssub.s32 %s26, %s33
      %p107 = scmp.eq.s32.totalorder %s106, 0
      %s109 = sadd.s32 %s108, 1
      %s110 = scalar_select %p107, %s108, %s109
      %p113 = pneg %p107
      %p114 = scmp.eq.s32.totalorder %s18, 1
      %p115 = por %p113, %p114
      %p116 = scmp.ne.s32.totalorder %s108, %s111
      %p117 = scmp.eq.s32.totalorder %s18, 0
      %p118 = por %p116, %p117
      %p119 = scmp.ne.s32.totalorder %s108, %s111
      %p120 = scmp.eq.s32.totalorder %s23, 1
      %p121 = por %p119, %p120
      %p122 = scmp.ne.s32.totalorder %s111, %s112
      %p123 = scmp.eq.s32.totalorder %s23, 0
      %p124 = por %p122, %p123
      %p125 = scmp.ne.s32.totalorder %s111, %s112
      %p126 = scmp.eq.s32.totalorder %s24, 1
      %p127 = por %p125, %p126
      %p129 = scmp.ne.s32.totalorder %s112, %s128
      %p130 = scmp.eq.s32.totalorder %s24, 0
      %p131 = por %p129, %p130
      %s132 = ssub.s32 %s26, %s33
      %p133 = scmp.eq.s32.totalorder %s132, 0
      %s135 = sadd.s32 %s134, 1
      %s136 = scalar_select %p133, %s134, %s135
      %p139 = pneg %p133
      %p140 = scmp.eq.s32.totalorder %s18, 1
      %p141 = por %p139, %p140
      %p142 = scmp.ne.s32.totalorder %s134, %s137
      %p143 = scmp.eq.s32.totalorder %s18, 0
      %p144 = por %p142, %p143
      %p145 = scmp.ne.s32.totalorder %s134, %s137
      %p146 = scmp.eq.s32.totalorder %s23, 1
      %p147 = por %p145, %p146
      %p148 = scmp.ne.s32.totalorder %s137, %s138
      %p149 = scmp.eq.s32.totalorder %s23, 0
      %p150 = por %p148, %p149
      %p151 = scmp.ne.s32.totalorder %s137, %s138
      %p152 = scmp.eq.s32.totalorder %s24, 1
      %p153 = por %p151, %p152
      %p155 = scmp.ne.s32.totalorder %s138, %s154
      %p156 = scmp.eq.s32.totalorder %s24, 0
      %p157 = por %p155, %p156
      %s158 = ssub.s32 %s25, %s37
      %s159 = ssub.s32 %s26, %s33
      %s160 = sor.u32 %s158, %s159
      %p161 = scmp.eq.s32.totalorder %s160, 0
      %s163 = sadd.s32 %s162, 1
      %s164 = scalar_select %p161, %s162, %s163
      %p167 = pneg %p161
      %p168 = scmp.eq.s32.totalorder %s18, 1
      %p169 = por %p167, %p168
      %p170 = scmp.ne.s32.totalorder %s162, %s165
      %p171 = scmp.eq.s32.totalorder %s18, 0
      %p172 = por %p170, %p171
      %p173 = scmp.ne.s32.totalorder %s162, %s165
      %p174 = scmp.eq.s32.totalorder %s23, 1
      %p175 = por %p173, %p174
      %p176 = scmp.ne.s32.totalorder %s165, %s166
      %p177 = scmp.eq.s32.totalorder %s23, 0
      %p178 = por %p176, %p177
      %p179 = scmp.ne.s32.totalorder %s165, %s166
      %p180 = scmp.eq.s32.totalorder %s24, 1
      %p181 = por %p179, %p180
      %p183 = scmp.ne.s32.totalorder %s166, %s182
      %p184 = scmp.eq.s32.totalorder %s24, 0
      %p185 = por %p183, %p184
      %p186 = scmp.le.s32.totalorder 1, %s18
      %p187 = scmp.lt.s32.totalorder %s18, 3
      %p188 = pnand %p186, %p187
      %p189 = pneg %p188
      // Predicated region
      $region9: #{tpu_custom_call.1} parent=5 // pred_check
        _
      $region10: #{tpu_custom_call.1} parent=5 // pred_check_branch
        %191 = sbr.rel (%p188) target = $region12
      $region11: #{tpu_custom_call.1} parent=5 // pred_region
        %s192 = ssub.s32 %s18, 1
        // Predicated region
        $region13: #{tpu_custom_call.1} parent=11 // pred_check
          %p193 = pneg %p77
        $region14: #{tpu_custom_call.1} parent=11 // pred_check_branch
          %195 = sbr.rel (%p193) target = $region16
        $region15: #{tpu_custom_call.1} parent=11 // pred_region
          _
        $region16: #{tpu_custom_call.1} parent=11 // pred_fallthru
          _
        // Predicated region
        $region17: #{tpu_custom_call.1} parent=11 // pred_check
          %p196 = pneg %p98
        $region18: #{tpu_custom_call.1} parent=11 // pred_check_branch
          %198 = sbr.rel (%p196) target = $region20
        $region19: #{tpu_custom_call.1} parent=11 // pred_region
          _
        $region20: #{tpu_custom_call.1} parent=11 // pred_fallthru
          _
        // Predicated region
        $region21: #{tpu_custom_call.1} parent=11 // pred_check
          %p199 = pneg %p124
        $region22: #{tpu_custom_call.1} parent=11 // pred_check_branch
          %201 = sbr.rel (%p199) target = $region24
        $region23: #{tpu_custom_call.1} parent=11 // pred_region
          %s203 = ssub.s32 512, 512
          %204 = vsyncadd [#allocation7], %s203
          %s205 = smul.addr %s28, 128
          %s206 = scalar_lea.hbm %s3, %s205
          %s207 = sshll.u32 [#allocation6], 4
          %s208 = int_to_ptr.vmem [resolvable:$true] %s207
          %213 = dma.hbm_to_vmem [thread:$0]  %s206, 512, %s208, [#allocation7], 128, 128, 8
        $region24: #{tpu_custom_call.1} parent=11 // pred_fallthru
          _
        // Predicated region
        $region25: #{tpu_custom_call.1} parent=11 // pred_check
          %p214 = pneg %p150
        $region26: #{tpu_custom_call.1} parent=11 // pred_check_branch
          %216 = sbr.rel (%p214) target = $region28
        $region27: #{tpu_custom_call.1} parent=11 // pred_region
          %p217 = scmp.lt.s32.totalorder %s28, 0
          %s218 = scalar_select %p217, %s28, 0
          %s219 = scalar_lea.vmem %s4, %s218
        $region28: #{tpu_custom_call.1} parent=11 // pred_fallthru
          _
      $region12: #{tpu_custom_call.1} parent=5 // pred_fallthru
        _
      %p220 = scmp.lt.s32.totalorder %s18, 2
      // Predicated region
      $region29: #{tpu_custom_call.1} parent=5 // pred_check
        %p221 = pneg %p220
      $region30: #{tpu_custom_call.1} parent=5 // pred_check_branch
        %223 = sbr.rel (%p221) target = $region32
      $region31: #{tpu_custom_call.1} parent=5 // pred_region
        // Predicated region
        $region33: #{tpu_custom_call.1} parent=31 // pred_check
          %p224 = pneg %p50
        $region34: #{tpu_custom_call.1} parent=31 // pred_check_branch
          %226 = sbr.rel (%p224) target = $region36
        $region35: #{tpu_custom_call.1} parent=31 // pred_region
          %s227 = sand.u32 %s40, 1
          %s228 = scalar_lea.sflag [#allocation4], %s227
          %s229 = sand.u32 %s40, 1
          %s230 = smul.addr %s229, 8
          %s231 = scalar_lea.vmem [#allocation3], %s230
          %s233 = ssub.s32 128, 128
          %234 = vsyncadd %s228, %s233
          %s235 = smul.addr %s25, 128
          %s236 = scalar_lea.hbm %s0, %s235
          %s238 = sshll.u32 %s231, 4
          %s239 = int_to_ptr.vmem [resolvable:$true] %s238
          %241 = dma.hbm_to_vmem [thread:$0]  %s236, 128, %s239, %s228
        $region36: #{tpu_custom_call.1} parent=31 // pred_fallthru
          _
      $region32: #{tpu_custom_call.1} parent=5 // pred_fallthru
        _
      %p242 = scmp.le.s32.totalorder 1, %s18
      %p243 = scmp.lt.s32.totalorder %s18, 3
      %p244 = pnand %p242, %p243
      %p245 = pneg %p244
      // Predicated region
      $region37: #{tpu_custom_call.1} parent=5 // pred_check
        _
      $region38: #{tpu_custom_call.1} parent=5 // pred_check_branch
        %247 = sbr.rel (%p244) target = $region40
      $region39: #{tpu_custom_call.1} parent=5 // pred_region
        %s248 = ssub.s32 %s18, 1
        %s249 = sand.u32 %s43, 1
        %s250 = scalar_lea.sflag [#allocation4], %s249
        %s251 = sand.u32 %s43, 1
        %s252 = smul.addr %s251, 8
        %s253 = scalar_lea.vmem [#allocation3], %s252
        // Predicated region
        $region41: #{tpu_custom_call.1} parent=39 // pred_check
          %p254 = pneg %p56
        $region42: #{tpu_custom_call.1} parent=39 // pred_check_branch
          %256 = sbr.rel (%p254) target = $region44
        $region43: #{tpu_custom_call.1} parent=39 // pred_region
          %257 = dma.done %s250, 128
        $region44: #{tpu_custom_call.1} parent=39 // pred_fallthru
          _
        // Predicated region
        $region45: #{tpu_custom_call.1} parent=39 // pred_check
          %p258 = pneg %p124
        $region46: #{tpu_custom_call.1} parent=39 // pred_check_branch
          %260 = sbr.rel (%p258) target = $region48
        $region47: #{tpu_custom_call.1} parent=39 // pred_region
          %261 = dma.done [#allocation7], 512
        $region48: #{tpu_custom_call.1} parent=39 // pred_fallthru
          _
        %s262 = sand.u32 %s43, 1
        %s263 = scalar_lea.sflag [#allocation4], %s262
        %s264 = sand.u32 %s43, 1
        %s265 = smul.addr %s264, 8
        %s266 = scalar_lea.vmem [#allocation3], %s265
        %p267 = pneg %p56
        %p268 = pneg %p53
        %p269 = pneg %p77
        %p270 = pneg %p74
        %p271 = pneg %p98
        %p272 = pneg %p95
        %p273 = pneg %p124
        %p274 = pneg %p121
        %p275 = scmp.lt.s32.totalorder %s28, 0
        %s276 = scalar_select %p275, %s28, 0
        %s277 = scalar_lea.vmem %s4, %s276
        %p278 = pneg %p150
        %p279 = pneg %p147
        %p280 = pneg %p178
        %p281 = pneg %p175
        %s282 = sand.u32 %s165, 1
        %s283 = scalar_lea.sflag [#allocation5], %s282
        %s284 = sand.u32 %s165, 1
        %s285 = smul.addr %s284, 8
        %s286 = scalar_lea.vmem [#allocation8], %s285
        %p287 = scmp.lt.s32.totalorder %s28, 0
        %s288 = scalar_select %p287, %s28, 0
        %s289 = scalar_lea.vmem %s4, %s288
        %p290 = scmp.eq.s32.totalorder %s28, 0
        // Predicated region
        $region49: #{tpu_custom_call.1} parent=39 // pred_check
          %p291 = pneg %p290
        $region50: #{tpu_custom_call.1} parent=39 // pred_check_branch
          %293 = sbr.rel (%p291) target = $region52
        $region51: #{tpu_custom_call.1} parent=39 // pred_region
          %v294 = vld [vmem:[%s253] sm:$0xff]
          %vm295 = vcmask 261120
          %v296 = vsel %vm295, %v294, 0.0
          %297 = vadd.xlane.f32.xlu0 %v296
          %v298 = vpop.xlane.xlu0 %297
          %v299 = vrcp.pop 32.0
          %v300 = vmul.f32 %v298, %v299
          %v301 = vsub.f32 %v294, %v300
          %v302 = vmul.f32 %v301, %v301
          %v303 = vsel %vm295, %v302, 0.0
          %304 = vadd.xlane.f32.xlu0 %v303
          %v305 = vpop.xlane.xlu0 %304
          %v306 = vmul.f32 %v305, %v299
          %v307 = vadd.f32 %v306, 1e-05
          %v308 = vrsqrt.pop %v307
          %v309 = vmul.f32 %v301, %v308
          %v310 = vld [vmem:[%s1] sm:$0x1]
          %v312 = vlaneseq
          %v313 = vshrl.u32 %v312, 7
          %v314 = vsub.s32 0, %v313
          %v315 = vrot.slane %v310, %v314
          %v317 = vmul.f32 %v309, %v315
          %v318 = vld [vmem:[%s2] sm:$0x1]
          %v320 = vlaneseq
          %v321 = vshrl.u32 %v320, 7
          %v322 = vsub.s32 0, %v321
          %v323 = vrot.slane %v318, %v322
          %v325 = vadd.f32 %v317, %v323
          %326 = vst.msk [vmem:[#allocation2] sm:$0xff] %vm295, %v325
        $region52: #{tpu_custom_call.1} parent=39 // pred_fallthru
          _
        %v327 = vld [vmem:[#allocation2] sm:$0xff]
        %v328 = vld [vmem:[#allocation6] sm:$0xff]
        %v329 = vld [vmem:[#allocation6 + $0x8] sm:$0xff]
        %v330 = vld [vmem:[#allocation6 + $0x10] sm:$0xff]
        %v331 = vld [vmem:[#allocation6 + $0x18] sm:$0xff]
        %v332 = vld [vmem:[%s289] sm:$0x1]
        %v334 = vlaneseq
        %v335 = vshrl.u32 %v334, 7
        %v336 = vsub.s32 0, %v335
        %v337 = vrot.slane %v332, %v336
        %vm339 = vcmask 261120
        %v341 = vsel %vm339, %v327, 0
        %343 = vmatprep.subr.mxu0 0.0
        %344 = vmatpush1.msra.mxu0 0.0
        %345 = vmatprep.subr.mxu0 0.0
        %346 = vmatpush1.msra.mxu0 0.0
        %347 = vmatprep.subr.mxu0 0.0
        %348 = vmatpush1.msra.mxu0 0.0
        %349 = vmatprep.subr.mxu0 0.0
        %350 = vmatpush1.msra.mxu0 0.0
        %351 = vmatprep.subr.mxu0 0.0
        %352 = vmatpush1.msra.mxu0 0.0
        %353 = vmatprep.subr.mxu0 0.0
        %354 = vmatpush1.msra.mxu0 0.0
        %355 = vmatprep.subr.mxu0 0.0
        %356 = vmatpush1.msra.mxu0 0.0
        %357 = vmatprep.subr.mxu0 0.0
        %358 = vmatpush1.msra.mxu0 0.0
        %359 = vmatprep.subr.mxu0 0.0
        %360 = vmatpush1.msra.mxu0 0.0
        %361 = vmatprep.subr.mxu0 0.0
        %362 = vmatpush1.msra.mxu0 0.0
        %363 = vmatprep.subr.mxu0 0.0
        %364 = vmatpush1.msra.mxu0 0.0
        %365 = vmatprep.subr.mxu0 0.0
        %366 = vmatpush1.msra.mxu0 0.0
        %367 = vmatprep.subr.mxu0 0.0
        %368 = vmatpush1.msra.mxu0 %v331
        %369 = vmatprep.subr.mxu0 0.0
        %370 = vmatpush1.msra.mxu0 %v330
        %371 = vmatprep.subr.mxu0 0.0
        %372 = vmatpush1.msra.mxu0 %v329
        %373 = vmatprep.subr.mxu0 0.0
        %374 = vmatpush1.msra.mxu0 %v328
        %375 = vmatprep.subr.mxu0 0.0
        %376 = vmatpush2.msra.mxu0 0.0
        %377 = vmatprep.subr.mxu0 0.0
        %378 = vmatpush2.msra.mxu0 0.0
        %379 = vmatprep.subr.mxu0 0.0
        %380 = vmatpush2.msra.mxu0 0.0
        %381 = vmatprep.subr.mxu0 0.0
        %382 = vmatpush2.msra.mxu0 0.0
        %383 = vmatprep.subr.mxu0 0.0
        %384 = vmatpush2.msra.mxu0 0.0
        %385 = vmatprep.subr.mxu0 0.0
        %386 = vmatpush2.msra.mxu0 0.0
        %387 = vmatprep.subr.mxu0 0.0
        %388 = vmatpush2.msra.mxu0 0.0
        %389 = vmatprep.subr.mxu0 0.0
        %390 = vmatpush2.msra.mxu0 0.0
        %391 = vmatprep.subr.mxu0 0.0
        %392 = vmatpush2.msra.mxu0 0.0
        %393 = vmatprep.subr.mxu0 0.0
        %394 = vmatpush2.msra.mxu0 0.0
        %395 = vmatprep.subr.mxu0 0.0
        %396 = vmatpush2.msra.mxu0 0.0
        %397 = vmatprep.subr.mxu0 0.0
        %398 = vmatpush2.msra.mxu0 0.0
        %399 = vmatprep.subr.mxu0 0.0
        %400 = vmatpush2.msra.mxu0 0.0
        %401 = vmatprep.subr.mxu0 0.0
        %402 = vmatpush2.msra.mxu0 0.0
        %403 = vmatprep.subr.mxu0 0.0
        %404 = vmatpush2.msra.mxu0 0.0
        %405 = vmatprep.subr.mxu0 0.0
        %406 = vmatpush2.msra.mxu0 0.0
        %407 = vmatprep.mubr.f32.mxu0 0.0
        %408 = vmatmul.mubr.f32.gmra.mxu0 %v341
        %v409 = vpop.f32.mrf.mxu0
        %v410 = vadd.f32 %v337, %v409
        %v411 = vpop.f32.mrf.mxu0
        %412 = vdwg.mxu0
        %413 = vst [vmem:[%s286] sm:$0xff] %v410
        %s414 = sand.u32 %s165, 1
        %s415 = scalar_lea.sflag [#allocation5], %s414
        %s416 = sand.u32 %s165, 1
        %s417 = smul.addr %s416, 8
        %s418 = scalar_lea.vmem [#allocation8], %s417
        // Predicated region
        $region53: #{tpu_custom_call.1} parent=39 // pred_check
          %p419 = pneg %p175
        $region54: #{tpu_custom_call.1} parent=39 // pred_check_branch
          %421 = sbr.rel (%p419) target = $region56
        $region55: #{tpu_custom_call.1} parent=39 // pred_region
          %s423 = ssub.s32 128, 128
          %424 = vsyncadd %s415, %s423
          %s425 = sadd.s32 %s28, %s27
          %s426 = smul.addr %s425, 128
          %s427 = scalar_lea.hbm %s5, %s426
          %s429 = sshll.u32 %s418, 4
          %s430 = int_to_ptr.vmem [resolvable:$true] %s429
          %432 = dma.vmem_to_hbm [thread:$0]  %s430, 128, %s427, %s415
        $region56: #{tpu_custom_call.1} parent=39 // pred_fallthru
          _
      $region40: #{tpu_custom_call.1} parent=5 // pred_fallthru
        _
      %p433 = scmp.le.s32.totalorder 2, %s18
      // Predicated region
      $region57: #{tpu_custom_call.1} parent=5 // pred_check
        %p434 = pneg %p433
      $region58: #{tpu_custom_call.1} parent=5 // pred_check_branch
        %436 = sbr.rel (%p434) target = $region60
      $region59: #{tpu_custom_call.1} parent=5 // pred_region
        %s437 = ssub.s32 %s18, 2
        // Predicated region
        $region61: #{tpu_custom_call.1} parent=59 // pred_check
          %p438 = pneg %p181
        $region62: #{tpu_custom_call.1} parent=59 // pred_check_branch
          %440 = sbr.rel (%p438) target = $region64
        $region63: #{tpu_custom_call.1} parent=59 // pred_region
          %s441 = sand.u32 %s166, 1
          %s442 = scalar_lea.sflag [#allocation5], %s441
          %s443 = sand.u32 %s166, 1
          %s444 = smul.addr %s443, 8
          %s445 = scalar_lea.vmem [#allocation8], %s444
          %446 = dma.done %s442, 128
        $region64: #{tpu_custom_call.1} parent=59 // pred_fallthru
          _
      $region60: #{tpu_custom_call.1} parent=5 // pred_fallthru
        _
    $region6: #{tpu_custom_call.1} parent=1 // loop_footer
      %s22 = sadd.s32 1, %s18
    $region7: #{tpu_custom_call.1} parent=1 // loop_footer_branch
      %17 = sbr.rel target = $region3
    $region8: #{tpu_custom_call.1} parent=1 // loop_exit
      _
    %447 = vsyncpa [#allocation4], 1
    %s448 = scalar_lea.sflag [#allocation4], 1
    %449 = vsyncpa %s448, 1
    %450 = vsyncpa [#allocation7], 1
    %451 = vsyncpa [#allocation5], 1
    %s452 = scalar_lea.sflag [#allocation5], 1
    %453 = vsyncpa %s452, 1

</llo_original>
